<compile_context>
chip_gen: v5e
topology: v5e:2x2
jax: 0.10.0
libtpu: 0.0.40
codegen_flags: <defaults>
</compile_context>

<pallas_src>
import jax
import jax.numpy as jnp
from jax.experimental import pallas as pl
from jax.experimental.pallas import tpu as pltpu

LANE = 128  # all hidden / output widths are padded to this


def _round_up(n, m):
    return (n + m - 1) // m * m


def _mlp_kernel(x_ref,
                w1_ref, b1_ref,
                w2_ref, b2_ref,
                w3_ref, b3_ref,
                w4_ref, b4_ref,
                o_ref):
    """One (TB, 128) batch tile: fc1..fc4 + ReLUs + softmax, fully fused."""
    x = x_ref[...].astype(jnp.bfloat16)                                # (TB, 128) f32 -> bf16

    # fc1 + ReLU
    h = jnp.dot(x, w1_ref[...], preferred_element_type=jnp.float32) + b1_ref[...]
    h = jnp.maximum(h, 0.0).astype(jnp.bfloat16)                       # (TB, 128)

    # fc2 + ReLU (64 real lanes, zero-padded to 128)
    h = jnp.dot(h, w2_ref[...], preferred_element_type=jnp.float32) + b2_ref[...]
    h = jnp.maximum(h, 0.0).astype(jnp.bfloat16)                       # (TB, 128)

    # fc3 + ReLU (32 real lanes, zero-padded to 128)
    h = jnp.dot(h, w3_ref[...], preferred_element_type=jnp.float32) + b3_ref[...]
    h = jnp.maximum(h, 0.0).astype(jnp.bfloat16)                       # (TB, 128)

    # fc4 logits (num_classes real lanes; padded lanes get bias = -inf, kept f32)
    logits = jnp.dot(h, w4_ref[...], preferred_element_type=jnp.float32) + b4_ref[...]

    # Softmax over lanes; -inf padded lanes contribute exp(-inf) == 0 exactly.
    m = jnp.max(logits, axis=-1, keepdims=True)
    e = jnp.exp(logits - m)
    denom = jnp.sum(e, axis=-1, keepdims=True)
    p = e * pl.reciprocal(denom, approx=True)
    o_ref[...] = p.astype(o_ref.dtype)                                 # (TB, 128) bf16


def prepare_params(params):
    """PyTorch-layout params {w_i:(out,in), b_i:(out,)} -> lane-padded bf16/f32 args.

    Weights are transposed to (in, out) and zero-padded to (128, 128) bf16.
    Biases are (1, 128) f32; the fc4 bias pad columns are -inf so the padded
    softmax lanes are exactly 0 (b4 must remain f32 for this to be safe).
    """
    flat = []
    for i in range(1, 5):
        w = params[f"w{i}"]          # (out, in) f32
        b = params[f"b{i}"]          # (out,)    f32
        wt = w.T                     # (in, out)
        w_pad = jnp.zeros((LANE, LANE), jnp.float32)
        w_pad = w_pad.at[: wt.shape[0], : wt.shape[1]].set(wt)
        if i == 4:
            b_pad = jnp.full((1, LANE), -jnp.inf, jnp.float32)
        else:
            b_pad = jnp.zeros((1, LANE), jnp.float32)
        b_pad = b_pad.at[0, : b.shape[0]].set(b)
        flat.append(w_pad.astype(jnp.bfloat16))
        flat.append(b_pad)
    return flat


def neural_net_forward(x, params, num_classes=5, max_batch_tile=2048):
    """x: (B, 128) float32.  params: PyTorch-layout dict (see init_params)."""
    B = x.shape[0]
    flat_params = prepare_params(params)

    # Batch tile: multiple of 16 sublanes (full bf16 vregs), up to 2048 rows.
    TB = min(max_batch_tile, _round_up(B, 16))
    # v7x has 2 TensorCores: if the whole batch would fit in a single tile,
    # split it into >=2 grid steps so "parallel" can shard them across cores.
    if TB >= 32 and _round_up(B, TB) == TB:
        TB = _round_up(pl.cdiv(TB, 2), 16)
    B_pad = _round_up(B, TB)

    # Pad only when needed; x stays f32 (cast to bf16 happens inside the kernel).
    x_in = x if B_pad == B else jnp.pad(x, ((0, B_pad - B), (0, 0)))

    grid = (B_pad // TB,)

    x_spec = pl.BlockSpec((TB, LANE), lambda i: (i, 0))
    resident = lambda shape: pl.BlockSpec(shape, lambda i: (0, 0))  # VMEM-resident
    in_specs = [x_spec] + [resident(p.shape) for p in flat_params]
    out_spec = pl.BlockSpec((TB, LANE), lambda i: (i, 0))

    out_padded = pl.pallas_call(
        _mlp_kernel,
        out_shape=jax.ShapeDtypeStruct((B_pad, LANE), jnp.bfloat16),
        grid=grid,
        in_specs=in_specs,
        out_specs=out_spec,
        compiler_params=pltpu.CompilerParams(
            dimension_semantics=("parallel",),   # shard batch tiles over v7x's 2 TCs
            vmem_limit_bytes=16 * 1024 * 1024,   # peak usage ~3.5 MiB even at TB=2048
        ),
    )(x_in, *flat_params)

    return out_padded[:B, :num_classes]


def init_params(key, num_classes=5):
    """PyTorch nn.Linear-style init: W (out,in), b (out,), uniform ±1/sqrt(fan_in)."""
    dims = [(128, 128), (64, 128), (32, 64), (num_classes, 32)]  # (out, in)
    params = {}
    for i, (fan_out, fan_in) in enumerate(dims, start=1):
        key, kw, kb = jax.random.split(key, 3)
        bound = 1.0 / jnp.sqrt(jnp.float32(fan_in))
        params[f"w{i}"] = jax.random.uniform(
            kw, (fan_out, fan_in), jnp.float32, minval=-bound, maxval=bound)
        params[f"b{i}"] = jax.random.uniform(
            kb, (fan_out,), jnp.float32, minval=-bound, maxval=bound)
    return params


def reference_forward(x, params):
    """Pure-JAX f32 reference matching the PyTorch module."""
    h = x
    for i in range(1, 4):
        h = jnp.maximum(h @ params[f"w{i}"].T + params[f"b{i}"], 0.0)
    logits = h @ params["w4"].T + params["b4"]
    return jax.nn.softmax(logits, axis=-1)


if __name__ == "__main__":
    key = jax.random.PRNGKey(0)
    k_params, k_x = jax.random.split(key)

    num_classes = 5
    params = init_params(k_params, num_classes=num_classes)
    x = jax.random.normal(k_x, (8, 128), dtype=jnp.float32)   # batch=8, features=128

    out = neural_net_forward(x, params, num_classes=num_classes)
    out = jax.block_until_ready(out)
    out_f32 = out.astype(jnp.float32)

    # Sanity checks (bf16 output + approx reciprocal -> slightly looser tolerances).
    assert out.shape == (8, num_classes)
    assert jnp.allclose(jnp.sum(out_f32, axis=-1), 1.0, atol=1e-2)

    ref = reference_forward(x, params)
    assert jnp.allclose(out_f32, ref, atol=3e-2), float(jnp.max(jnp.abs(out_f32 - ref)))

    print("KERNEL_OK")
</pallas_src>

<mosaic_0001>
module attributes {stable_mosaic.version = 11 : i64} {
  func.func @_mlp_kernel(%arg0: i32, %arg1: memref<16x128xf32, #tpu.memory_space<vmem>>, %arg2: memref<128x128xbf16, #tpu.memory_space<vmem>>, %arg3: memref<1x128xf32, #tpu.memory_space<vmem>>, %arg4: memref<128x128xbf16, #tpu.memory_space<vmem>>, %arg5: memref<1x128xf32, #tpu.memory_space<vmem>>, %arg6: memref<128x128xbf16, #tpu.memory_space<vmem>>, %arg7: memref<1x128xf32, #tpu.memory_space<vmem>>, %arg8: memref<128x128xbf16, #tpu.memory_space<vmem>>, %arg9: memref<1x128xf32, #tpu.memory_space<vmem>>, %arg10: memref<16x128xbf16, #tpu.memory_space<vmem>>) attributes {dimension_semantics = [#tpu.dimension_semantics<parallel>], iteration_bounds = array<i64: 1>, scalar_prefetch = 0 : i64, scratch_operands = 0 : i64, tpu.core_type = #tpu.core_type<tc>, window_params = [{transform_indices = @transform_0, window_bounds = array<i64: 16, 128>}, {pipeline_mode = #tpu.pipeline_mode<synchronous>, transform_indices = @transform_1, window_bounds = array<i64: 128, 128>}, {pipeline_mode = #tpu.pipeline_mode<synchronous>, transform_indices = @transform_2, window_bounds = array<i64: 1, 128>}, {pipeline_mode = #tpu.pipeline_mode<synchronous>, transform_indices = @transform_3, window_bounds = array<i64: 128, 128>}, {pipeline_mode = #tpu.pipeline_mode<synchronous>, transform_indices = @transform_4, window_bounds = array<i64: 1, 128>}, {pipeline_mode = #tpu.pipeline_mode<synchronous>, transform_indices = @transform_5, window_bounds = array<i64: 128, 128>}, {pipeline_mode = #tpu.pipeline_mode<synchronous>, transform_indices = @transform_6, window_bounds = array<i64: 1, 128>}, {pipeline_mode = #tpu.pipeline_mode<synchronous>, transform_indices = @transform_7, window_bounds = array<i64: 128, 128>}, {pipeline_mode = #tpu.pipeline_mode<synchronous>, transform_indices = @transform_8, window_bounds = array<i64: 1, 128>}, {transform_indices = @transform_9, window_bounds = array<i64: 16, 128>}]} {
    %c0 = arith.constant 0 : index
    %c0_0 = arith.constant 0 : index
    %0 = vector.load %arg1[%c0, %c0_0] : memref<16x128xf32, #tpu.memory_space<vmem>>, vector<16x128xf32>
    %1 = arith.truncf %0 : vector<16x128xf32> to vector<16x128xbf16>
    %c0_1 = arith.constant 0 : index
    %c0_2 = arith.constant 0 : index
    %2 = vector.load %arg2[%c0_1, %c0_2] : memref<128x128xbf16, #tpu.memory_space<vmem>>, vector<128x128xbf16>
    %cst = arith.constant dense<0.000000e+00> : vector<16x128xf32>
    %3 = tpu.matmul %1, %2, %cst {dimension_numbers = #tpu.dot_dimension_numbers<[1], [0], [0], [1], [0, 0, 1, 1], [], []>} : vector<16x128xbf16>, vector<128x128xbf16>, vector<16x128xf32> -> vector<16x128xf32>
    %c0_3 = arith.constant 0 : index
    %c0_4 = arith.constant 0 : index
    %4 = vector.load %arg3[%c0_3, %c0_4] : memref<1x128xf32, #tpu.memory_space<vmem>>, vector<1x128xf32>
    %5 = vector.broadcast %4 : vector<1x128xf32> to vector<16x128xf32>
    %6 = arith.addf %3, %5 : vector<16x128xf32>
    %cst_5 = arith.constant 0.000000e+00 : f32
    %7 = vector.broadcast %cst_5 : f32 to vector<16x128xf32>
    %8 = arith.maximumf %6, %7 : vector<16x128xf32>
    %9 = arith.truncf %8 : vector<16x128xf32> to vector<16x128xbf16>
    %c0_6 = arith.constant 0 : index
    %c0_7 = arith.constant 0 : index
    %10 = vector.load %arg4[%c0_6, %c0_7] : memref<128x128xbf16, #tpu.memory_space<vmem>>, vector<128x128xbf16>
    %cst_8 = arith.constant dense<0.000000e+00> : vector<16x128xf32>
    %11 = tpu.matmul %9, %10, %cst_8 {dimension_numbers = #tpu.dot_dimension_numbers<[1], [0], [0], [1], [0, 0, 1, 1], [], []>} : vector<16x128xbf16>, vector<128x128xbf16>, vector<16x128xf32> -> vector<16x128xf32>
    %c0_9 = arith.constant 0 : index
    %c0_10 = arith.constant 0 : index
    %12 = vector.load %arg5[%c0_9, %c0_10] : memref<1x128xf32, #tpu.memory_space<vmem>>, vector<1x128xf32>
    %13 = vector.broadcast %12 : vector<1x128xf32> to vector<16x128xf32>
    %14 = arith.addf %11, %13 : vector<16x128xf32>
    %cst_11 = arith.constant 0.000000e+00 : f32
    %15 = vector.broadcast %cst_11 : f32 to vector<16x128xf32>
    %16 = arith.maximumf %14, %15 : vector<16x128xf32>
    %17 = arith.truncf %16 : vector<16x128xf32> to vector<16x128xbf16>
    %c0_12 = arith.constant 0 : index
    %c0_13 = arith.constant 0 : index
    %18 = vector.load %arg6[%c0_12, %c0_13] : memref<128x128xbf16, #tpu.memory_space<vmem>>, vector<128x128xbf16>
    %cst_14 = arith.constant dense<0.000000e+00> : vector<16x128xf32>
    %19 = tpu.matmul %17, %18, %cst_14 {dimension_numbers = #tpu.dot_dimension_numbers<[1], [0], [0], [1], [0, 0, 1, 1], [], []>} : vector<16x128xbf16>, vector<128x128xbf16>, vector<16x128xf32> -> vector<16x128xf32>
    %c0_15 = arith.constant 0 : index
    %c0_16 = arith.constant 0 : index
    %20 = vector.load %arg7[%c0_15, %c0_16] : memref<1x128xf32, #tpu.memory_space<vmem>>, vector<1x128xf32>
    %21 = vector.broadcast %20 : vector<1x128xf32> to vector<16x128xf32>
    %22 = arith.addf %19, %21 : vector<16x128xf32>
    %cst_17 = arith.constant 0.000000e+00 : f32
    %23 = vector.broadcast %cst_17 : f32 to vector<16x128xf32>
    %24 = arith.maximumf %22, %23 : vector<16x128xf32>
    %25 = arith.truncf %24 : vector<16x128xf32> to vector<16x128xbf16>
    %c0_18 = arith.constant 0 : index
    %c0_19 = arith.constant 0 : index
    %26 = vector.load %arg8[%c0_18, %c0_19] : memref<128x128xbf16, #tpu.memory_space<vmem>>, vector<128x128xbf16>
    %cst_20 = arith.constant dense<0.000000e+00> : vector<16x128xf32>
    %27 = tpu.matmul %25, %26, %cst_20 {dimension_numbers = #tpu.dot_dimension_numbers<[1], [0], [0], [1], [0, 0, 1, 1], [], []>} : vector<16x128xbf16>, vector<128x128xbf16>, vector<16x128xf32> -> vector<16x128xf32>
    %c0_21 = arith.constant 0 : index
    %c0_22 = arith.constant 0 : index
    %28 = vector.load %arg9[%c0_21, %c0_22] : memref<1x128xf32, #tpu.memory_space<vmem>>, vector<1x128xf32>
    %29 = vector.broadcast %28 : vector<1x128xf32> to vector<16x128xf32>
    %30 = arith.addf %27, %29 : vector<16x128xf32>
    %cst_23 = arith.constant dense<0xFF800000> : vector<16xf32>
    %31 = vector.multi_reduction <maximumf>, %30, %cst_23 [1] : vector<16x128xf32> to vector<16xf32>
    %32 = vector.shape_cast %31 : vector<16xf32> to vector<16x1xf32>
    %33 = vector.broadcast %32 : vector<16x1xf32> to vector<16x128xf32>
    %34 = arith.subf %30, %33 : vector<16x128xf32>
    %35 = math.exp %34 : vector<16x128xf32>
    %cst_24 = arith.constant dense<0.000000e+00> : vector<16xf32>
    %36 = vector.multi_reduction <add>, %35, %cst_24 [1] : vector<16x128xf32> to vector<16xf32>
    %37 = vector.shape_cast %36 : vector<16xf32> to vector<16x1xf32>
    %38 = tpu.reciprocal %37 {approx = true} : vector<16x1xf32> -> vector<16x1xf32>
    %39 = vector.broadcast %38 : vector<16x1xf32> to vector<16x128xf32>
    %40 = arith.mulf %35, %39 : vector<16x128xf32>
    %41 = arith.truncf %40 : vector<16x128xf32> to vector<16x128xbf16>
    %c0_25 = arith.constant 0 : index
    %c0_26 = arith.constant 0 : index
    %42 = vector.load %arg10[%c0_25, %c0_26] : memref<16x128xbf16, #tpu.memory_space<vmem>>, vector<16x128xbf16>
    tpu.vector_store %arg10[%c0_25, %c0_26], %41 {strides = array<i32>} : memref<16x128xbf16, #tpu.memory_space<vmem>>, vector<16x128xbf16>,
    return
  }
  func.func @transform_0(%arg0: i32) -> (i32, i32) {
    %c0_i32 = arith.constant 0 : i32
    %c0_i32_0 = arith.constant 0 : i32
    return %arg0, %c0_i32 : i32, i32
  }
  func.func @transform_1(%arg0: i32) -> (i32, i32) {
    %c0_i32 = arith.constant 0 : i32
    %c0_i32_0 = arith.constant 0 : i32
    %c0_i32_1 = arith.constant 0 : i32
    return %c0_i32, %c0_i32_0 : i32, i32
  }
  func.func @transform_2(%arg0: i32) -> (i32, i32) {
    %c0_i32 = arith.constant 0 : i32
    %c0_i32_0 = arith.constant 0 : i32
    %c0_i32_1 = arith.constant 0 : i32
    return %c0_i32, %c0_i32_0 : i32, i32
  }
  func.func @transform_3(%arg0: i32) -> (i32, i32) {
    %c0_i32 = arith.constant 0 : i32
    %c0_i32_0 = arith.constant 0 : i32
    %c0_i32_1 = arith.constant 0 : i32
    return %c0_i32, %c0_i32_0 : i32, i32
  }
  func.func @transform_4(%arg0: i32) -> (i32, i32) {
    %c0_i32 = arith.constant 0 : i32
    %c0_i32_0 = arith.constant 0 : i32
    %c0_i32_1 = arith.constant 0 : i32
    return %c0_i32, %c0_i32_0 : i32, i32
  }
  func.func @transform_5(%arg0: i32) -> (i32, i32) {
    %c0_i32 = arith.constant 0 : i32
    %c0_i32_0 = arith.constant 0 : i32
    %c0_i32_1 = arith.constant 0 : i32
    return %c0_i32, %c0_i32_0 : i32, i32
  }
  func.func @transform_6(%arg0: i32) -> (i32, i32) {
    %c0_i32 = arith.constant 0 : i32
    %c0_i32_0 = arith.constant 0 : i32
    %c0_i32_1 = arith.constant 0 : i32
    return %c0_i32, %c0_i32_0 : i32, i32
  }
  func.func @transform_7(%arg0: i32) -> (i32, i32) {
    %c0_i32 = arith.constant 0 : i32
    %c0_i32_0 = arith.constant 0 : i32
    %c0_i32_1 = arith.constant 0 : i32
    return %c0_i32, %c0_i32_0 : i32, i32
  }
  func.func @transform_8(%arg0: i32) -> (i32, i32) {
    %c0_i32 = arith.constant 0 : i32
    %c0_i32_0 = arith.constant 0 : i32
    %c0_i32_1 = arith.constant 0 : i32
    return %c0_i32, %c0_i32_0 : i32, i32
  }
  func.func @transform_9(%arg0: i32) -> (i32, i32) {
    %c0_i32 = arith.constant 0 : i32
    %c0_i32_0 = arith.constant 0 : i32
    return %arg0, %c0_i32 : i32, i32
  }
}

</mosaic_0001>

<llo_original>
// kernel: tpu_custom_call.1
$region0: #{tpu_custom_call.1}
  #allocation0 [shape = 'u32[]', space=smem, size = 0x4, offset = 0x4, fixed_abs, tag = 'smem constant byte address 0x4 - core index']
  #allocation1 [shape = 'u32[72,128]{1,0:T(1,128)}', space=vmem, size = 0x9000, scoped, tag = 'internal scratch']
  %s0 = inlined_call_operand.hbm [shape: f32[16,128], index: 0, kind: input, shape index: {}]
  %s1 = inlined_call_operand.hbm [shape: bf16[128,128], index: 1, kind: input, shape index: {}]
  %s2 = inlined_call_operand.vmem [shape: f32[1,128], index: 2, kind: input, shape index: {}]
  %s3 = inlined_call_operand.hbm [shape: bf16[128,128], index: 3, kind: input, shape index: {}]
  %s4 = inlined_call_operand.vmem [shape: f32[1,128], index: 4, kind: input, shape index: {}]
  %s5 = inlined_call_operand.hbm [shape: bf16[128,128], index: 5, kind: input, shape index: {}]
  %s6 = inlined_call_operand.vmem [shape: f32[1,128], index: 6, kind: input, shape index: {}]
  %s7 = inlined_call_operand.hbm [shape: bf16[128,128], index: 7, kind: input, shape index: {}]
  %s8 = inlined_call_operand.vmem [shape: f32[1,128], index: 8, kind: input, shape index: {}]
  %s9 = inlined_call_operand.hbm [shape: bf16[16,128], index: 9, kind: output, shape index: {}]
  %s10 = sld [smem:[#allocation0]]
  $region66: #{tpu_custom_call.1} parent=0
    _
  %s12 = ssub.s32 1, %s10
  %s13 = scalar_select 0, %s12, %s10
  $region1: #{tpu_custom_call.1} parent=0
    #allocation2 [shape = 'u8[8192]{0}', space=vmem, size = 0x2000, scoped, tag = 'input window, operand 0, single buffered']
    #allocation3 [shape = 's32[1]{0}', space=sflag, size = 0x4, scoped, tag = 'scoped memory for tpu_custom_call.1']
    #allocation4 [shape = 's32[1]{0}', space=sflag, size = 0x4, scoped, tag = 'scoped memory for tpu_custom_call.1']
    #allocation5 [shape = 'u8[32768]{0}', space=vmem, size = 0x8000, scoped, tag = 'input window, operand 1, single buffered']
    #allocation6 [shape = 's32[1]{0}', space=sflag, size = 0x4, scoped, tag = 'scoped memory for tpu_custom_call.1']
    #allocation7 [shape = 'u8[32768]{0}', space=vmem, size = 0x8000, scoped, tag = 'input window, operand 3, single buffered']
    #allocation8 [shape = 'u8[32768]{0}', space=vmem, size = 0x8000, scoped, tag = 'input window, operand 5, single buffered']
    #allocation9 [shape = 's32[1]{0}', space=sflag, size = 0x4, scoped, tag = 'scoped memory for tpu_custom_call.1']
    #allocation10 [shape = 'u8[32768]{0}', space=vmem, size = 0x8000, scoped, tag = 'input window, operand 7, single buffered']
    #allocation11 [shape = 'u8[4096]{0}', space=vmem, size = 0x1000, scoped, tag = 'output window, operand 0, single buffered']
    %14 = vsyncpa [#allocation3], 0
    %15 = vsyncpa [#allocation6], 0
    %16 = vsyncpa [#allocation9], 0
    %17 = vsyncpa [#allocation4], 0
    // Predicated region
    $region2: #{tpu_custom_call.1} parent=1 // pred_check
      _
    $region3: #{tpu_custom_call.1} parent=1 // pred_check_branch
      %19 = sbr.rel (0) target = $region5
    $region4: #{tpu_custom_call.1} parent=1 // pred_region
      %21 = vsyncadd [#allocation3], 0
      %s22 = sshll.u32 %s0, 4
      %s23 = int_to_ptr.hbm [resolvable:$true] %s22
      %s24 = sshll.u32 [#allocation2], 4
      %s25 = int_to_ptr.vmem [resolvable:$true] %s24
      %30 = dma.hbm_to_vmem [thread:$0]  %s23, 256, %s25, [#allocation3], 128, 128, 8
    $region5: #{tpu_custom_call.1} parent=1 // pred_fallthru
      _
    // Predicated region
    $region6: #{tpu_custom_call.1} parent=1 // pred_check
      _
    $region7: #{tpu_custom_call.1} parent=1 // pred_check_branch
      %32 = sbr.rel (0) target = $region9
    $region8: #{tpu_custom_call.1} parent=1 // pred_region
      %34 = vsyncadd [#allocation6], 0
      %s35 = sshll.u32 %s1, 4
      %s36 = int_to_ptr.hbm [resolvable:$true] %s35
      %s37 = sshll.u32 [#allocation5], 4
      %s38 = int_to_ptr.vmem [resolvable:$true] %s37
      %43 = dma.hbm_to_vmem [thread:$0]  %s36, 1024, %s38, [#allocation6], 64, 64, 4
    $region9: #{tpu_custom_call.1} parent=1 // pred_fallthru
      _
    // Predicated region
    $region10: #{tpu_custom_call.1} parent=1 // pred_check
      _
    $region11: #{tpu_custom_call.1} parent=1 // pred_check_branch
      %45 = sbr.rel (0) target = $region13
    $region12: #{tpu_custom_call.1} parent=1 // pred_region
      _
    $region13: #{tpu_custom_call.1} parent=1 // pred_fallthru
      _
    // Predicated region
    $region14: #{tpu_custom_call.1} parent=1 // pred_check
      _
    $region15: #{tpu_custom_call.1} parent=1 // pred_check_branch
      %47 = sbr.rel (0) target = $region17
    $region16: #{tpu_custom_call.1} parent=1 // pred_region
      %49 = vsyncadd [#allocation6], 0
      %s50 = sshll.u32 %s3, 4
      %s51 = int_to_ptr.hbm [resolvable:$true] %s50
      %s52 = sshll.u32 [#allocation7], 4
      %s53 = int_to_ptr.vmem [resolvable:$true] %s52
      %58 = dma.hbm_to_vmem [thread:$0]  %s51, 1024, %s53, [#allocation6], 64, 64, 4
    $region17: #{tpu_custom_call.1} parent=1 // pred_fallthru
      _
    // Predicated region
    $region18: #{tpu_custom_call.1} parent=1 // pred_check
      _
    $region19: #{tpu_custom_call.1} parent=1 // pred_check_branch
      %60 = sbr.rel (0) target = $region21
    $region20: #{tpu_custom_call.1} parent=1 // pred_region
      _
    $region21: #{tpu_custom_call.1} parent=1 // pred_fallthru
      _
    // Predicated region
    $region22: #{tpu_custom_call.1} parent=1 // pred_check
      _
    $region23: #{tpu_custom_call.1} parent=1 // pred_check_branch
      %62 = sbr.rel (0) target = $region25
    $region24: #{tpu_custom_call.1} parent=1 // pred_region
      %64 = vsyncadd [#allocation9], 0
      %s65 = sshll.u32 %s5, 4
      %s66 = int_to_ptr.hbm [resolvable:$true] %s65
      %s67 = sshll.u32 [#allocation8], 4
      %s68 = int_to_ptr.vmem [resolvable:$true] %s67
      %73 = dma.hbm_to_vmem [thread:$0]  %s66, 1024, %s68, [#allocation9], 64, 64, 4
    $region25: #{tpu_custom_call.1} parent=1 // pred_fallthru
      _
    // Predicated region
    $region26: #{tpu_custom_call.1} parent=1 // pred_check
      _
    $region27: #{tpu_custom_call.1} parent=1 // pred_check_branch
      %75 = sbr.rel (0) target = $region29
    $region28: #{tpu_custom_call.1} parent=1 // pred_region
      _
    $region29: #{tpu_custom_call.1} parent=1 // pred_fallthru
      _
    // Predicated region
    $region30: #{tpu_custom_call.1} parent=1 // pred_check
      _
    $region31: #{tpu_custom_call.1} parent=1 // pred_check_branch
      %77 = sbr.rel (0) target = $region33
    $region32: #{tpu_custom_call.1} parent=1 // pred_region
      %79 = vsyncadd [#allocation9], 0
      %s80 = sshll.u32 %s7, 4
      %s81 = int_to_ptr.hbm [resolvable:$true] %s80
      %s82 = sshll.u32 [#allocation10], 4
      %s83 = int_to_ptr.vmem [resolvable:$true] %s82
      %88 = dma.hbm_to_vmem [thread:$0]  %s81, 1024, %s83, [#allocation9], 64, 64, 4
    $region33: #{tpu_custom_call.1} parent=1 // pred_fallthru
      _
    // Predicated region
    $region34: #{tpu_custom_call.1} parent=1 // pred_check
      _
    $region35: #{tpu_custom_call.1} parent=1 // pred_check_branch
      %90 = sbr.rel (0) target = $region37
    $region36: #{tpu_custom_call.1} parent=1 // pred_region
      _
    $region37: #{tpu_custom_call.1} parent=1 // pred_fallthru
      _
    // Predicated region
    $region38: #{tpu_custom_call.1} parent=1 // pred_check
      _
    $region39: #{tpu_custom_call.1} parent=1 // pred_check_branch
      %92 = sbr.rel (0) target = $region41
    $region40: #{tpu_custom_call.1} parent=1 // pred_region
      %94 = dma.done [#allocation3], 256
    $region41: #{tpu_custom_call.1} parent=1 // pred_fallthru
      _
    // Predicated region
    $region42: #{tpu_custom_call.1} parent=1 // pred_check
      _
    $region43: #{tpu_custom_call.1} parent=1 // pred_check_branch
      %96 = sbr.rel (0) target = $region45
    $region44: #{tpu_custom_call.1} parent=1 // pred_region
      %98 = dma.done [#allocation6], 1024
    $region45: #{tpu_custom_call.1} parent=1 // pred_fallthru
      _
    // Predicated region
    $region46: #{tpu_custom_call.1} parent=1 // pred_check
      _
    $region47: #{tpu_custom_call.1} parent=1 // pred_check_branch
      %100 = sbr.rel (0) target = $region49
    $region48: #{tpu_custom_call.1} parent=1 // pred_region
      %102 = dma.done [#allocation6], 1024
    $region49: #{tpu_custom_call.1} parent=1 // pred_fallthru
      _
    // Predicated region
    $region50: #{tpu_custom_call.1} parent=1 // pred_check
      _
    $region51: #{tpu_custom_call.1} parent=1 // pred_check_branch
      %104 = sbr.rel (0) target = $region53
    $region52: #{tpu_custom_call.1} parent=1 // pred_region
      %106 = dma.done [#allocation9], 1024
    $region53: #{tpu_custom_call.1} parent=1 // pred_fallthru
      _
    // Predicated region
    $region54: #{tpu_custom_call.1} parent=1 // pred_check
      _
    $region55: #{tpu_custom_call.1} parent=1 // pred_check_branch
      %108 = sbr.rel (0) target = $region57
    $region56: #{tpu_custom_call.1} parent=1 // pred_region
      %110 = dma.done [#allocation9], 1024
    $region57: #{tpu_custom_call.1} parent=1 // pred_fallthru
      _
    %v111 = vld [vmem:[#allocation2] sm:$0xff]
    %v112 = vld [vmem:[#allocation2 + $0x8] sm:$0xff]
    %v113 = vpack.c.bf16 %v112, %v111
    %v114 = vld [vmem:[#allocation5] sm:$0xf]
    %v115 = vld [vmem:[#allocation5 + $0x4] sm:$0xf]
    %v116 = vld [vmem:[#allocation5 + $0x8] sm:$0xf]
    %v117 = vld [vmem:[#allocation5 + $0xc] sm:$0xf]
    %v118 = vld [vmem:[#allocation5 + $0x10] sm:$0xf]
    %v119 = vld [vmem:[#allocation5 + $0x14] sm:$0xf]
    %v120 = vld [vmem:[#allocation5 + $0x18] sm:$0xf]
    %v121 = vld [vmem:[#allocation5 + $0x1c] sm:$0xf]
    %v122 = vld [vmem:[#allocation5 + $0x20] sm:$0xf]
    %v123 = vld [vmem:[#allocation5 + $0x24] sm:$0xf]
    %v124 = vld [vmem:[#allocation5 + $0x28] sm:$0xf]
    %v125 = vld [vmem:[#allocation5 + $0x2c] sm:$0xf]
    %v126 = vld [vmem:[#allocation5 + $0x30] sm:$0xf]
    %v127 = vld [vmem:[#allocation5 + $0x34] sm:$0xf]
    %v128 = vld [vmem:[#allocation5 + $0x38] sm:$0xf]
    %v129 = vld [vmem:[#allocation5 + $0x3c] sm:$0xf]
    %v130 = vld [vmem:[%s2] sm:$0x1]
    %v132 = vperm.slane %v130, 0
    %v150 = vunpack.c.l.b16 %v114
    %v151 = vunpack.c.l.b16 %v115
    %v152 = vunpack.c.l.b16 %v116
    %v153 = vunpack.c.l.b16 %v117
    %v154 = vunpack.c.l.b16 %v118
    %v155 = vunpack.c.l.b16 %v119
    %v156 = vunpack.c.l.b16 %v120
    %v157 = vunpack.c.l.b16 %v121
    %v158 = vunpack.c.l.b16 %v122
    %v159 = vunpack.c.l.b16 %v123
    %v160 = vunpack.c.l.b16 %v124
    %v161 = vunpack.c.l.b16 %v125
    %v162 = vunpack.c.l.b16 %v126
    %v163 = vunpack.c.l.b16 %v127
    %v164 = vunpack.c.l.b16 %v128
    %v165 = vunpack.c.l.b16 %v129
    %v166 = vpack.c.b16 %v151, %v150
    %v167 = vpack.c.b16 %v153, %v152
    %v168 = vpack.c.b16 %v155, %v154
    %v169 = vpack.c.b16 %v157, %v156
    %v170 = vpack.c.b16 %v159, %v158
    %v171 = vpack.c.b16 %v161, %v160
    %v172 = vpack.c.b16 %v163, %v162
    %v173 = vpack.c.b16 %v165, %v164
    %182 = vmatpush.bf16.msra.mxu0 %v173
    %183 = vmatpush.bf16.msra.mxu0 %v172
    %184 = vmatpush.bf16.msra.mxu0 %v171
    %185 = vmatpush.bf16.msra.mxu0 %v170
    %186 = vmatpush.bf16.msra.mxu0 %v169
    %187 = vmatpush.bf16.msra.mxu0 %v168
    %188 = vmatpush.bf16.msra.mxu0 %v167
    %189 = vmatpush.bf16.msra.mxu0 %v166
    %190 = vmatmul.bf16.gmra.mxu0 %v113
    %v191 = vpop.f32.mrf.mxu0
    %v192 = vadd.f32 %v132, %v191
    %v193 = vpop.f32.mrf.mxu0
    %v194 = vadd.f32 %v132, %v193
    %195 = vdwg.mxu0
    %v196 = vmax.f32 %v192, 0.0
    %v197 = vmax.f32 %v194, 0.0
    %v198 = vpack.c.bf16 %v197, %v196
    %v199 = vld [vmem:[#allocation7] sm:$0xf]
    %v200 = vld [vmem:[#allocation7 + $0x4] sm:$0xf]
    %v201 = vld [vmem:[#allocation7 + $0x8] sm:$0xf]
    %v202 = vld [vmem:[#allocation7 + $0xc] sm:$0xf]
    %v203 = vld [vmem:[#allocation7 + $0x10] sm:$0xf]
    %v204 = vld [vmem:[#allocation7 + $0x14] sm:$0xf]
    %v205 = vld [vmem:[#allocation7 + $0x18] sm:$0xf]
    %v206 = vld [vmem:[#allocation7 + $0x1c] sm:$0xf]
    %v207 = vld [vmem:[#allocation7 + $0x20] sm:$0xf]
    %v208 = vld [vmem:[#allocation7 + $0x24] sm:$0xf]
    %v209 = vld [vmem:[#allocation7 + $0x28] sm:$0xf]
    %v210 = vld [vmem:[#allocation7 + $0x2c] sm:$0xf]
    %v211 = vld [vmem:[#allocation7 + $0x30] sm:$0xf]
    %v212 = vld [vmem:[#allocation7 + $0x34] sm:$0xf]
    %v213 = vld [vmem:[#allocation7 + $0x38] sm:$0xf]
    %v214 = vld [vmem:[#allocation7 + $0x3c] sm:$0xf]
    %v215 = vld [vmem:[%s4] sm:$0x1]
    %v217 = vperm.slane %v215, 0
    %v235 = vunpack.c.l.b16 %v199
    %v236 = vunpack.c.l.b16 %v200
    %v237 = vunpack.c.l.b16 %v201
    %v238 = vunpack.c.l.b16 %v202
    %v239 = vunpack.c.l.b16 %v203
    %v240 = vunpack.c.l.b16 %v204
    %v241 = vunpack.c.l.b16 %v205
    %v242 = vunpack.c.l.b16 %v206
    %v243 = vunpack.c.l.b16 %v207
    %v244 = vunpack.c.l.b16 %v208
    %v245 = vunpack.c.l.b16 %v209
    %v246 = vunpack.c.l.b16 %v210
    %v247 = vunpack.c.l.b16 %v211
    %v248 = vunpack.c.l.b16 %v212
    %v249 = vunpack.c.l.b16 %v213
    %v250 = vunpack.c.l.b16 %v214
    %v251 = vpack.c.b16 %v236, %v235
    %v252 = vpack.c.b16 %v238, %v237
    %v253 = vpack.c.b16 %v240, %v239
    %v254 = vpack.c.b16 %v242, %v241
    %v255 = vpack.c.b16 %v244, %v243
    %v256 = vpack.c.b16 %v246, %v245
    %v257 = vpack.c.b16 %v248, %v247
    %v258 = vpack.c.b16 %v250, %v249
    %267 = vmatpush.bf16.msra.mxu0 %v258
    %268 = vmatpush.bf16.msra.mxu0 %v257
    %269 = vmatpush.bf16.msra.mxu0 %v256
    %270 = vmatpush.bf16.msra.mxu0 %v255
    %271 = vmatpush.bf16.msra.mxu0 %v254
    %272 = vmatpush.bf16.msra.mxu0 %v253
    %273 = vmatpush.bf16.msra.mxu0 %v252
    %274 = vmatpush.bf16.msra.mxu0 %v251
    %275 = vmatmul.bf16.gmra.mxu0 %v198
    %v276 = vpop.f32.mrf.mxu0
    %v277 = vadd.f32 %v217, %v276
    %v278 = vpop.f32.mrf.mxu0
    %v279 = vadd.f32 %v217, %v278
    %280 = vdwg.mxu0
    %v281 = vmax.f32 %v277, 0.0
    %v282 = vmax.f32 %v279, 0.0
    %v283 = vpack.c.bf16 %v282, %v281
    %v284 = vld [vmem:[#allocation8] sm:$0xf]
    %v285 = vld [vmem:[#allocation8 + $0x4] sm:$0xf]
    %v286 = vld [vmem:[#allocation8 + $0x8] sm:$0xf]
    %v287 = vld [vmem:[#allocation8 + $0xc] sm:$0xf]
    %v288 = vld [vmem:[#allocation8 + $0x10] sm:$0xf]
    %v289 = vld [vmem:[#allocation8 + $0x14] sm:$0xf]
    %v290 = vld [vmem:[#allocation8 + $0x18] sm:$0xf]
    %v291 = vld [vmem:[#allocation8 + $0x1c] sm:$0xf]
    %v292 = vld [vmem:[#allocation8 + $0x20] sm:$0xf]
    %v293 = vld [vmem:[#allocation8 + $0x24] sm:$0xf]
    %v294 = vld [vmem:[#allocation8 + $0x28] sm:$0xf]
    %v295 = vld [vmem:[#allocation8 + $0x2c] sm:$0xf]
    %v296 = vld [vmem:[#allocation8 + $0x30] sm:$0xf]
    %v297 = vld [vmem:[#allocation8 + $0x34] sm:$0xf]
    %v298 = vld [vmem:[#allocation8 + $0x38] sm:$0xf]
    %v299 = vld [vmem:[#allocation8 + $0x3c] sm:$0xf]
    %v300 = vld [vmem:[%s6] sm:$0x1]
    %v302 = vperm.slane %v300, 0
    %v320 = vunpack.c.l.b16 %v284
    %v321 = vunpack.c.l.b16 %v285
    %v322 = vunpack.c.l.b16 %v286
    %v323 = vunpack.c.l.b16 %v287
    %v324 = vunpack.c.l.b16 %v288
    %v325 = vunpack.c.l.b16 %v289
    %v326 = vunpack.c.l.b16 %v290
    %v327 = vunpack.c.l.b16 %v291
    %v328 = vunpack.c.l.b16 %v292
    %v329 = vunpack.c.l.b16 %v293
    %v330 = vunpack.c.l.b16 %v294
    %v331 = vunpack.c.l.b16 %v295
    %v332 = vunpack.c.l.b16 %v296
    %v333 = vunpack.c.l.b16 %v297
    %v334 = vunpack.c.l.b16 %v298
    %v335 = vunpack.c.l.b16 %v299
    %v336 = vpack.c.b16 %v321, %v320
    %v337 = vpack.c.b16 %v323, %v322
    %v338 = vpack.c.b16 %v325, %v324
    %v339 = vpack.c.b16 %v327, %v326
    %v340 = vpack.c.b16 %v329, %v328
    %v341 = vpack.c.b16 %v331, %v330
    %v342 = vpack.c.b16 %v333, %v332
    %v343 = vpack.c.b16 %v335, %v334
    %352 = vmatpush.bf16.msra.mxu0 %v343
    %353 = vmatpush.bf16.msra.mxu0 %v342
    %354 = vmatpush.bf16.msra.mxu0 %v341
    %355 = vmatpush.bf16.msra.mxu0 %v340
    %356 = vmatpush.bf16.msra.mxu0 %v339
    %357 = vmatpush.bf16.msra.mxu0 %v338
    %358 = vmatpush.bf16.msra.mxu0 %v337
    %359 = vmatpush.bf16.msra.mxu0 %v336
    %360 = vmatmul.bf16.gmra.mxu0 %v283
    %v361 = vpop.f32.mrf.mxu0
    %v362 = vadd.f32 %v302, %v361
    %v363 = vpop.f32.mrf.mxu0
    %v364 = vadd.f32 %v302, %v363
    %365 = vdwg.mxu0
    %v366 = vmax.f32 %v362, 0.0
    %v367 = vmax.f32 %v364, 0.0
    %v368 = vpack.c.bf16 %v367, %v366
    %v369 = vld [vmem:[#allocation10] sm:$0xf]
    %v370 = vld [vmem:[#allocation10 + $0x4] sm:$0xf]
    %v371 = vld [vmem:[#allocation10 + $0x8] sm:$0xf]
    %v372 = vld [vmem:[#allocation10 + $0xc] sm:$0xf]
    %v373 = vld [vmem:[#allocation10 + $0x10] sm:$0xf]
    %v374 = vld [vmem:[#allocation10 + $0x14] sm:$0xf]
    %v375 = vld [vmem:[#allocation10 + $0x18] sm:$0xf]
    %v376 = vld [vmem:[#allocation10 + $0x1c] sm:$0xf]
    %v377 = vld [vmem:[#allocation10 + $0x20] sm:$0xf]
    %v378 = vld [vmem:[#allocation10 + $0x24] sm:$0xf]
    %v379 = vld [vmem:[#allocation10 + $0x28] sm:$0xf]
    %v380 = vld [vmem:[#allocation10 + $0x2c] sm:$0xf]
    %v381 = vld [vmem:[#allocation10 + $0x30] sm:$0xf]
    %v382 = vld [vmem:[#allocation10 + $0x34] sm:$0xf]
    %v383 = vld [vmem:[#allocation10 + $0x38] sm:$0xf]
    %v384 = vld [vmem:[#allocation10 + $0x3c] sm:$0xf]
    %v385 = vld [vmem:[%s8] sm:$0x1]
    %v387 = vperm.slane %v385, 0
    %v405 = vunpack.c.l.b16 %v369
    %v406 = vunpack.c.l.b16 %v370
    %v407 = vunpack.c.l.b16 %v371
    %v408 = vunpack.c.l.b16 %v372
    %v409 = vunpack.c.l.b16 %v373
    %v410 = vunpack.c.l.b16 %v374
    %v411 = vunpack.c.l.b16 %v375
    %v412 = vunpack.c.l.b16 %v376
    %v413 = vunpack.c.l.b16 %v377
    %v414 = vunpack.c.l.b16 %v378
    %v415 = vunpack.c.l.b16 %v379
    %v416 = vunpack.c.l.b16 %v380
    %v417 = vunpack.c.l.b16 %v381
    %v418 = vunpack.c.l.b16 %v382
    %v419 = vunpack.c.l.b16 %v383
    %v420 = vunpack.c.l.b16 %v384
    %v421 = vpack.c.b16 %v406, %v405
    %v422 = vpack.c.b16 %v408, %v407
    %v423 = vpack.c.b16 %v410, %v409
    %v424 = vpack.c.b16 %v412, %v411
    %v425 = vpack.c.b16 %v414, %v413
    %v426 = vpack.c.b16 %v416, %v415
    %v427 = vpack.c.b16 %v418, %v417
    %v428 = vpack.c.b16 %v420, %v419
    %437 = vmatpush.bf16.msra.mxu0 %v428
    %438 = vmatpush.bf16.msra.mxu0 %v427
    %439 = vmatpush.bf16.msra.mxu0 %v426
    %440 = vmatpush.bf16.msra.mxu0 %v425
    %441 = vmatpush.bf16.msra.mxu0 %v424
    %442 = vmatpush.bf16.msra.mxu0 %v423
    %443 = vmatpush.bf16.msra.mxu0 %v422
    %444 = vmatpush.bf16.msra.mxu0 %v421
    %445 = vmatmul.bf16.gmra.mxu0 %v368
    %v446 = vpop.f32.mrf.mxu0
    %v447 = vadd.f32 %v387, %v446
    %v448 = vpop.f32.mrf.mxu0
    %v449 = vadd.f32 %v387, %v448
    %450 = vdwg.mxu0
    %451 = vmax.xlane.f32.xlu0 %v447
    %v452 = vpop.xlane.xlu0 %451
    %453 = vmax.xlane.f32.xlu0 %v449
    %v454 = vpop.xlane.xlu0 %453
    %v455 = vsub.f32 %v447, %v452
    %v456 = vsub.f32 %v449, %v454
    %v457 = vmul.f32 %v455, 1.442695
    %v458 = vpow.pop %v457
    %v459 = vmul.f32 %v456, 1.442695
    %v460 = vpow.pop %v459
    %461 = vadd.xlane.f32.xlu0 %v458
    %v462 = vpop.xlane.xlu0 %461
    %463 = vadd.xlane.f32.xlu0 %v460
    %v464 = vpop.xlane.xlu0 %463
    %v465 = vrcp.pop %v462
    %v466 = vrcp.pop %v464
    %v467 = vmul.f32 %v458, %v465
    %v468 = vmul.f32 %v460, %v466
    %v469 = vpack.c.bf16 %v467, %v467
    %v470 = vpack.c.bf16 %v468, %v468
    %471 = vst [vmem:[#allocation11] sm:$0xf] %v469
    %472 = vst [vmem:[#allocation11 + $0x4] sm:$0xf] %v470
    // Predicated region
    $region58: #{tpu_custom_call.1} parent=1 // pred_check
      _
    $region59: #{tpu_custom_call.1} parent=1 // pred_check_branch
      %474 = sbr.rel (0) target = $region61
    $region60: #{tpu_custom_call.1} parent=1 // pred_region
      %476 = vsyncadd [#allocation4], 0
      %s477 = sshll.u32 [#allocation11], 4
      %s478 = int_to_ptr.vmem [resolvable:$true] %s477
      %s479 = sshll.u32 %s9, 4
      %s480 = int_to_ptr.hbm [resolvable:$true] %s479
      %485 = dma.vmem_to_hbm [thread:$0]  %s478, 128, %s480, [#allocation4], 64, 64, 4
    $region61: #{tpu_custom_call.1} parent=1 // pred_fallthru
      _
    // Predicated region
    $region62: #{tpu_custom_call.1} parent=1 // pred_check
      _
    $region63: #{tpu_custom_call.1} parent=1 // pred_check_branch
      %487 = sbr.rel (0) target = $region65
    $region64: #{tpu_custom_call.1} parent=1 // pred_region
      %489 = dma.done [#allocation4], 128
    $region65: #{tpu_custom_call.1} parent=1 // pred_fallthru
      _
    %490 = vsyncpa [#allocation3], 1
    %491 = vsyncpa [#allocation6], 1
    %492 = vsyncpa [#allocation9], 1
    %493 = vsyncpa [#allocation4], 1

</llo_original>
